<compile_context>
chip_gen: v5e
topology: v5e:2x2
jax: 0.10.0
libtpu: 0.0.40
codegen_flags: <defaults>
</compile_context>

<pallas_src>
import jax
import jax.numpy as jnp
from jax.experimental import pallas as pl
from jax.experimental.pallas import tpu as pltpu


# ----------------------------------------------------------------------------
# Fused kernel: all selected Linear layers + concat in one grid step.
# ----------------------------------------------------------------------------
def _make_fusion_kernel(batch, token_counts, token_offsets):
    """Kernel closed over static batch size, per-layer token counts and
    per-layer concat offsets (all Python ints -> fully static slicing)."""
    num_layers = len(token_counts)

    def kernel(*refs):
        # refs = (f2d_0..f2d_{L-1}, w_0..w_{L-1}, b_0..b_{L-1}, o_ref)
        f_refs = refs[:num_layers]                     # (B*N_l, D_l)
        w_refs = refs[num_layers:2 * num_layers]       # (D_l, out_dim)
        b_refs = refs[2 * num_layers:3 * num_layers]   # (1, out_dim)
        o_ref = refs[3 * num_layers]                   # (B, N_total, out_dim)

        for l in range(num_layers):                    # static Python unroll
            n = token_counts[l]
            off = token_offsets[l]
            # (B*N_l, D_l) @ (D_l, out_dim) on the MXU, f32 accumulation.
            y2d = jnp.dot(f_refs[l][...], w_refs[l][...],
                          preferred_element_type=jnp.float32)
            y2d = (y2d + b_refs[l][...]).astype(o_ref.dtype)
            # Scatter each batch's token block to its static concat offset.
            for b in range(batch):                     # static, tiny B
                o_ref[b, off:off + n, :] = y2d[b * n:(b + 1) * n, :]

    return kernel


# ----------------------------------------------------------------------------
# FusionModule forward: one fused pallas_call (Linear per selected layer + cat)
# ----------------------------------------------------------------------------
def fusion_module_forward(fpn, weights, biases, fpn_layers):
    """fpn: list of (B, N_i, D_i); weights[i]: (D_i, out_dim); biases[i]: (out_dim,).
    Returns concat([Linear_i(fpn[i]) for i in fpn_layers], axis=1)."""
    assert len(fpn) == len(weights) == len(biases), \
        "the length of output encoder must equal to the length of embed_dims"

    # Gather selected layers in fpn_layers order (only these reach the output).
    feats = [fpn[i] for i in fpn_layers]
    ws = [weights[i] for i in fpn_layers]
    bs = [biases[i].reshape(1, -1) for i in fpn_layers]

    B = feats[0].shape[0]
    out_dim = ws[0].shape[1]
    token_counts = tuple(int(f.shape[1]) for f in feats)
    offsets = [0]
    for n in token_counts[:-1]:
        offsets.append(offsets[-1] + n)
    n_total = sum(token_counts)

    # Flatten (B, N_i, D_i) -> (B*N_i, D_i) outside the kernel (free XLA view):
    # the kernel then needs no value reshapes at all.
    feats2d = [f.reshape(B * f.shape[1], f.shape[2]) for f in feats]

    kernel = _make_fusion_kernel(B, token_counts, tuple(offsets))

    # Block == full array everywhere: no (8,128) tiling constraints, one grid step.
    in_specs = (
        [pl.BlockSpec(x.shape, lambda i: (0, 0)) for x in feats2d]
        + [pl.BlockSpec(w.shape, lambda i: (0, 0)) for w in ws]
        + [pl.BlockSpec(b.shape, lambda i: (0, 0)) for b in bs]
    )
    out_specs = pl.BlockSpec((B, n_total, out_dim), lambda i: (0, 0, 0))

    return pl.pallas_call(
        kernel,
        out_shape=jax.ShapeDtypeStruct((B, n_total, out_dim), feats[0].dtype),
        grid=(1,),
        in_specs=in_specs,
        out_specs=out_specs,
        compiler_params=pltpu.CompilerParams(
            dimension_semantics=("arbitrary",),
        ),
    )(*feats2d, *ws, *bs)


# ----------------------------------------------------------------------------
# Deterministic parameter init (nn.Linear: W (out,in), b (out,)) stored
# transposed as (in, out) for channels-last matmul.
# ----------------------------------------------------------------------------
def init_params(key, embed_dims, out_dim):
    weights, biases = [], []
    for i, dim in enumerate(embed_dims):
        kw, kb = jax.random.split(jax.random.fold_in(key, i))
        bound = 1.0 / jnp.sqrt(dim)
        w = jax.random.uniform(kw, (dim, out_dim), jnp.float32, -bound, bound)
        b = jax.random.uniform(kb, (out_dim,), jnp.float32, -bound, bound)
        weights.append(w)
        biases.append(b)
    return weights, biases


if __name__ == "__main__":
    key = jax.random.PRNGKey(0)

    # Module config: img_size=(32,32) -> h, w = 8, 8 (sizes the FPN maps)
    img_size = (32, 32)
    h, w = img_size[0] // 4, img_size[1] // 4       # 8 x 8
    embed_dims = [32, 64]                           # per-FPN-layer channel dims
    out_dim = 32
    fpn_layers = [0, 1]
    B = 2

    # FPN features (B, N_i, D_i): layer0 at h*w tokens, layer1 at (h/2)*(w/2) tokens
    k0, k1, kp = jax.random.split(key, 3)
    fpn = [
        jax.random.normal(k0, (B, h * w, embed_dims[0]), jnp.float32),                # (2, 64, 32)
        jax.random.normal(k1, (B, (h // 2) * (w // 2), embed_dims[1]), jnp.float32),  # (2, 16, 64)
    ]

    weights, biases = init_params(kp, embed_dims, out_dim)

    out = fusion_module_forward(fpn, weights, biases, fpn_layers)
    out = jax.block_until_ready(out)

    # Reference check in plain JAX
    ref = jnp.concatenate(
        [jnp.einsum("bnd,de->bne", fpn[i], weights[i]) + biases[i] for i in fpn_layers],
        axis=1,
    )
    assert out.shape == (B, h * w + (h // 2) * (w // 2), out_dim), out.shape
    assert jnp.allclose(out, ref, atol=1e-5, rtol=1e-5)

    print("KERNEL_OK")
</pallas_src>

<mosaic_0001>
module attributes {stable_mosaic.version = 11 : i64} {
  func.func @kernel(%arg0: i32, %arg1: memref<128x32xf32, #tpu.memory_space<vmem>>, %arg2: memref<32x64xf32, #tpu.memory_space<vmem>>, %arg3: memref<32x32xf32, #tpu.memory_space<vmem>>, %arg4: memref<64x32xf32, #tpu.memory_space<vmem>>, %arg5: memref<1x32xf32, #tpu.memory_space<vmem>>, %arg6: memref<1x32xf32, #tpu.memory_space<vmem>>, %arg7: memref<2x80x32xf32, #tpu.memory_space<vmem>>) attributes {dimension_semantics = [#tpu.dimension_semantics<arbitrary>], iteration_bounds = array<i64: 1>, scalar_prefetch = 0 : i64, scratch_operands = 0 : i64, tpu.core_type = #tpu.core_type<tc>, window_params = [{pipeline_mode = #tpu.pipeline_mode<synchronous>, transform_indices = @transform_0, window_bounds = array<i64: 128, 32>}, {pipeline_mode = #tpu.pipeline_mode<synchronous>, transform_indices = @transform_1, window_bounds = array<i64: 32, 64>}, {pipeline_mode = #tpu.pipeline_mode<synchronous>, transform_indices = @transform_2, window_bounds = array<i64: 32, 32>}, {pipeline_mode = #tpu.pipeline_mode<synchronous>, transform_indices = @transform_3, window_bounds = array<i64: 64, 32>}, {pipeline_mode = #tpu.pipeline_mode<synchronous>, transform_indices = @transform_4, window_bounds = array<i64: 1, 32>}, {pipeline_mode = #tpu.pipeline_mode<synchronous>, transform_indices = @transform_5, window_bounds = array<i64: 1, 32>}, {pipeline_mode = #tpu.pipeline_mode<synchronous>, transform_indices = @transform_6, window_bounds = array<i64: 2, 80, 32>}]} {
    %c0 = arith.constant 0 : index
    %c0_0 = arith.constant 0 : index
    %0 = vector.load %arg1[%c0, %c0_0] : memref<128x32xf32, #tpu.memory_space<vmem>>, vector<128x32xf32>
    %c0_1 = arith.constant 0 : index
    %c0_2 = arith.constant 0 : index
    %1 = vector.load %arg3[%c0_1, %c0_2] : memref<32x32xf32, #tpu.memory_space<vmem>>, vector<32x32xf32>
    %cst = arith.constant dense<0.000000e+00> : vector<128x32xf32>
    %2 = tpu.matmul %0, %1, %cst {dimension_numbers = #tpu.dot_dimension_numbers<[1], [0], [0], [1], [0, 0, 1, 1], [], []>} : vector<128x32xf32>, vector<32x32xf32>, vector<128x32xf32> -> vector<128x32xf32>
    %c0_3 = arith.constant 0 : index
    %c0_4 = arith.constant 0 : index
    %3 = vector.load %arg5[%c0_3, %c0_4] : memref<1x32xf32, #tpu.memory_space<vmem>>, vector<1x32xf32>
    %4 = vector.broadcast %3 : vector<1x32xf32> to vector<128x32xf32>
    %5 = arith.addf %2, %4 : vector<128x32xf32>
    %6 = vector.extract_strided_slice %5 {offsets = [0, 0], sizes = [64, 32], strides = [1, 1]} : vector<128x32xf32> to vector<64x32xf32>
    %c0_5 = arith.constant 0 : index
    %c0_6 = arith.constant 0 : index
    %c0_7 = arith.constant 0 : index
    %7 = vector.load %arg7[%c0_5, %c0_6, %c0_7] : memref<2x80x32xf32, #tpu.memory_space<vmem>>, vector<1x64x32xf32>
    %8 = vector.shape_cast %7 : vector<1x64x32xf32> to vector<64x32xf32>
    %9 = vector.shape_cast %6 : vector<64x32xf32> to vector<1x64x32xf32>
    tpu.vector_store %arg7[%c0_5, %c0_6, %c0_7], %9 {strides = array<i32>} : memref<2x80x32xf32, #tpu.memory_space<vmem>>, vector<1x64x32xf32>,
    %10 = vector.extract_strided_slice %5 {offsets = [64, 0], sizes = [64, 32], strides = [1, 1]} : vector<128x32xf32> to vector<64x32xf32>
    %c1 = arith.constant 1 : index
    %c0_8 = arith.constant 0 : index
    %c0_9 = arith.constant 0 : index
    %11 = vector.load %arg7[%c1, %c0_8, %c0_9] : memref<2x80x32xf32, #tpu.memory_space<vmem>>, vector<1x64x32xf32>
    %12 = vector.shape_cast %11 : vector<1x64x32xf32> to vector<64x32xf32>
    %13 = vector.shape_cast %10 : vector<64x32xf32> to vector<1x64x32xf32>
    tpu.vector_store %arg7[%c1, %c0_8, %c0_9], %13 {strides = array<i32>} : memref<2x80x32xf32, #tpu.memory_space<vmem>>, vector<1x64x32xf32>,
    %c0_10 = arith.constant 0 : index
    %c0_11 = arith.constant 0 : index
    %14 = vector.load %arg2[%c0_10, %c0_11] : memref<32x64xf32, #tpu.memory_space<vmem>>, vector<32x64xf32>
    %c0_12 = arith.constant 0 : index
    %c0_13 = arith.constant 0 : index
    %15 = vector.load %arg4[%c0_12, %c0_13] : memref<64x32xf32, #tpu.memory_space<vmem>>, vector<64x32xf32>
    %cst_14 = arith.constant dense<0.000000e+00> : vector<32x32xf32>
    %16 = tpu.matmul %14, %15, %cst_14 {dimension_numbers = #tpu.dot_dimension_numbers<[1], [0], [0], [1], [0, 0, 1, 1], [], []>} : vector<32x64xf32>, vector<64x32xf32>, vector<32x32xf32> -> vector<32x32xf32>
    %c0_15 = arith.constant 0 : index
    %c0_16 = arith.constant 0 : index
    %17 = vector.load %arg6[%c0_15, %c0_16] : memref<1x32xf32, #tpu.memory_space<vmem>>, vector<1x32xf32>
    %18 = vector.broadcast %17 : vector<1x32xf32> to vector<32x32xf32>
    %19 = arith.addf %16, %18 : vector<32x32xf32>
    %20 = vector.extract_strided_slice %19 {offsets = [0, 0], sizes = [16, 32], strides = [1, 1]} : vector<32x32xf32> to vector<16x32xf32>
    %c0_17 = arith.constant 0 : index
    %c64 = arith.constant 64 : index
    %c0_18 = arith.constant 0 : index
    %21 = vector.load %arg7[%c0_17, %c64, %c0_18] : memref<2x80x32xf32, #tpu.memory_space<vmem>>, vector<1x16x32xf32>
    %22 = vector.shape_cast %21 : vector<1x16x32xf32> to vector<16x32xf32>
    %23 = vector.shape_cast %20 : vector<16x32xf32> to vector<1x16x32xf32>
    tpu.vector_store %arg7[%c0_17, %c64, %c0_18], %23 {strides = array<i32>} : memref<2x80x32xf32, #tpu.memory_space<vmem>>, vector<1x16x32xf32>,
    %24 = vector.extract_strided_slice %19 {offsets = [16, 0], sizes = [16, 32], strides = [1, 1]} : vector<32x32xf32> to vector<16x32xf32>
    %c1_19 = arith.constant 1 : index
    %c64_20 = arith.constant 64 : index
    %c0_21 = arith.constant 0 : index
    %25 = vector.load %arg7[%c1_19, %c64_20, %c0_21] : memref<2x80x32xf32, #tpu.memory_space<vmem>>, vector<1x16x32xf32>
    %26 = vector.shape_cast %25 : vector<1x16x32xf32> to vector<16x32xf32>
    %27 = vector.shape_cast %24 : vector<16x32xf32> to vector<1x16x32xf32>
    tpu.vector_store %arg7[%c1_19, %c64_20, %c0_21], %27 {strides = array<i32>} : memref<2x80x32xf32, #tpu.memory_space<vmem>>, vector<1x16x32xf32>,
    return
  }
  func.func @transform_0(%arg0: i32) -> (i32, i32) {
    %c0_i32 = arith.constant 0 : i32
    %c0_i32_0 = arith.constant 0 : i32
    %c0_i32_1 = arith.constant 0 : i32
    return %c0_i32, %c0_i32_0 : i32, i32
  }
  func.func @transform_1(%arg0: i32) -> (i32, i32) {
    %c0_i32 = arith.constant 0 : i32
    %c0_i32_0 = arith.constant 0 : i32
    %c0_i32_1 = arith.constant 0 : i32
    return %c0_i32, %c0_i32_0 : i32, i32
  }
  func.func @transform_2(%arg0: i32) -> (i32, i32) {
    %c0_i32 = arith.constant 0 : i32
    %c0_i32_0 = arith.constant 0 : i32
    %c0_i32_1 = arith.constant 0 : i32
    return %c0_i32, %c0_i32_0 : i32, i32
  }
  func.func @transform_3(%arg0: i32) -> (i32, i32) {
    %c0_i32 = arith.constant 0 : i32
    %c0_i32_0 = arith.constant 0 : i32
    %c0_i32_1 = arith.constant 0 : i32
    return %c0_i32, %c0_i32_0 : i32, i32
  }
  func.func @transform_4(%arg0: i32) -> (i32, i32) {
    %c0_i32 = arith.constant 0 : i32
    %c0_i32_0 = arith.constant 0 : i32
    %c0_i32_1 = arith.constant 0 : i32
    return %c0_i32, %c0_i32_0 : i32, i32
  }
  func.func @transform_5(%arg0: i32) -> (i32, i32) {
    %c0_i32 = arith.constant 0 : i32
    %c0_i32_0 = arith.constant 0 : i32
    %c0_i32_1 = arith.constant 0 : i32
    return %c0_i32, %c0_i32_0 : i32, i32
  }
  func.func @transform_6(%arg0: i32) -> (i32, i32, i32) {
    %c0_i32 = arith.constant 0 : i32
    %c0_i32_0 = arith.constant 0 : i32
    %c0_i32_1 = arith.constant 0 : i32
    %c0_i32_2 = arith.constant 0 : i32
    return %c0_i32, %c0_i32_0, %c0_i32_1 : i32, i32, i32
  }
}

</mosaic_0001>

<llo_original>
// kernel: tpu_custom_call.1
$region0: #{tpu_custom_call.1}
  #allocation0 [shape = 'u32[]', space=smem, size = 0x4, offset = 0x4, fixed_abs, tag = 'smem constant byte address 0x4 - core index']
  #allocation1 [shape = 'u32[72,128]{1,0:T(1,128)}', space=vmem, size = 0x9000, scoped, tag = 'internal scratch']
  %s0 = inlined_call_operand.vmem [shape: f32[128,32], index: 0, kind: input, shape index: {}]
  %s1 = inlined_call_operand.vmem [shape: f32[32,64], index: 1, kind: input, shape index: {}]
  %s2 = inlined_call_operand.vmem [shape: f32[32,32], index: 2, kind: input, shape index: {}]
  %s3 = inlined_call_operand.vmem [shape: f32[64,32], index: 3, kind: input, shape index: {}]
  %s4 = inlined_call_operand.vmem [shape: f32[1,32], index: 4, kind: input, shape index: {}]
  %s5 = inlined_call_operand.vmem [shape: f32[1,32], index: 5, kind: input, shape index: {}]
  %s6 = inlined_call_operand.vmem [shape: f32[2,80,32], index: 6, kind: output, shape index: {}]
  %s7 = sld [smem:[#allocation0]]
  $region34: #{tpu_custom_call.1} parent=0
    _
  %s9 = ssub.s32 1, %s7
  %s10 = scalar_select 0, %s9, %s7
  // Predicated region
  $region2: #{tpu_custom_call.1} parent=0 // pred_check
    _
  $region3: #{tpu_custom_call.1} parent=0 // pred_check_branch
    %12 = sbr.rel (0) target = $region5
  $region4: #{tpu_custom_call.1} parent=0 // pred_region
    _
  $region5: #{tpu_custom_call.1} parent=0 // pred_fallthru
    _
  // Predicated region
  $region6: #{tpu_custom_call.1} parent=0 // pred_check
    _
  $region7: #{tpu_custom_call.1} parent=0 // pred_check_branch
    %14 = sbr.rel (0) target = $region9
  $region8: #{tpu_custom_call.1} parent=0 // pred_region
    _
  $region9: #{tpu_custom_call.1} parent=0 // pred_fallthru
    _
  // Predicated region
  $region10: #{tpu_custom_call.1} parent=0 // pred_check
    _
  $region11: #{tpu_custom_call.1} parent=0 // pred_check_branch
    %16 = sbr.rel (0) target = $region13
  $region12: #{tpu_custom_call.1} parent=0 // pred_region
    _
  $region13: #{tpu_custom_call.1} parent=0 // pred_fallthru
    _
  // Predicated region
  $region14: #{tpu_custom_call.1} parent=0 // pred_check
    _
  $region15: #{tpu_custom_call.1} parent=0 // pred_check_branch
    %18 = sbr.rel (0) target = $region17
  $region16: #{tpu_custom_call.1} parent=0 // pred_region
    _
  $region17: #{tpu_custom_call.1} parent=0 // pred_fallthru
    _
  // Predicated region
  $region18: #{tpu_custom_call.1} parent=0 // pred_check
    _
  $region19: #{tpu_custom_call.1} parent=0 // pred_check_branch
    %20 = sbr.rel (0) target = $region21
  $region20: #{tpu_custom_call.1} parent=0 // pred_region
    _
  $region21: #{tpu_custom_call.1} parent=0 // pred_fallthru
    _
  // Predicated region
  $region22: #{tpu_custom_call.1} parent=0 // pred_check
    _
  $region23: #{tpu_custom_call.1} parent=0 // pred_check_branch
    %22 = sbr.rel (0) target = $region25
  $region24: #{tpu_custom_call.1} parent=0 // pred_region
    _
  $region25: #{tpu_custom_call.1} parent=0 // pred_fallthru
    _
  %v23 = vld [vmem:[%s0] sm:$0xff]
  %v24 = vld [vmem:[%s0 + $0x8] sm:$0xff]
  %v25 = vld [vmem:[%s0 + $0x10] sm:$0xff]
  %v26 = vld [vmem:[%s0 + $0x18] sm:$0xff]
  %v27 = vld [vmem:[%s0 + $0x20] sm:$0xff]
  %v28 = vld [vmem:[%s0 + $0x28] sm:$0xff]
  %v29 = vld [vmem:[%s0 + $0x30] sm:$0xff]
  %v30 = vld [vmem:[%s0 + $0x38] sm:$0xff]
  %v31 = vld [vmem:[%s0 + $0x40] sm:$0xff]
  %v32 = vld [vmem:[%s0 + $0x48] sm:$0xff]
  %v33 = vld [vmem:[%s0 + $0x50] sm:$0xff]
  %v34 = vld [vmem:[%s0 + $0x58] sm:$0xff]
  %v35 = vld [vmem:[%s0 + $0x60] sm:$0xff]
  %v36 = vld [vmem:[%s0 + $0x68] sm:$0xff]
  %v37 = vld [vmem:[%s0 + $0x70] sm:$0xff]
  %v38 = vld [vmem:[%s0 + $0x78] sm:$0xff]
  %v39 = vld [vmem:[%s2] sm:$0xff]
  %v40 = vld [vmem:[%s2 + $0x8] sm:$0xff]
  %v41 = vld [vmem:[%s2 + $0x10] sm:$0xff]
  %v42 = vld [vmem:[%s2 + $0x18] sm:$0xff]
  %v43 = vld [vmem:[%s4] sm:$0x1]
  %v45 = vperm.slane %v43, 0
  %vm47 = vcmask 261120
  %v49 = vsel %vm47, %v23, 0
  %v52 = vsel %vm47, %v24, 0
  %v55 = vsel %vm47, %v25, 0
  %v58 = vsel %vm47, %v26, 0
  %v61 = vsel %vm47, %v27, 0
  %v64 = vsel %vm47, %v28, 0
  %v67 = vsel %vm47, %v29, 0
  %v70 = vsel %vm47, %v30, 0
  %v73 = vsel %vm47, %v31, 0
  %v76 = vsel %vm47, %v32, 0
  %v79 = vsel %vm47, %v33, 0
  %v82 = vsel %vm47, %v34, 0
  %v85 = vsel %vm47, %v35, 0
  %v88 = vsel %vm47, %v36, 0
  %v91 = vsel %vm47, %v37, 0
  %v94 = vsel %vm47, %v38, 0
  %96 = vmatpush.msra.mxu0 0.0
  %97 = vmatpush.msra.mxu0 0.0
  %98 = vmatpush.msra.mxu0 0.0
  %99 = vmatpush.msra.mxu0 0.0
  %100 = vmatpush.msra.mxu0 0.0
  %101 = vmatpush.msra.mxu0 0.0
  %102 = vmatpush.msra.mxu0 0.0
  %103 = vmatpush.msra.mxu0 0.0
  %104 = vmatpush.msra.mxu0 0.0
  %105 = vmatpush.msra.mxu0 0.0
  %106 = vmatpush.msra.mxu0 0.0
  %107 = vmatpush.msra.mxu0 0.0
  %108 = vmatpush.msra.mxu0 %v42
  %109 = vmatpush.msra.mxu0 %v41
  %110 = vmatpush.msra.mxu0 %v40
  %111 = vmatpush.msra.mxu0 %v39
  %112 = vmatmul.f32.gmra.mxu0 %v49
  %v113 = vpop.f32.mrf.mxu0
  %v114 = vadd.f32 %v45, %v113
  %115 = vmatmul.f32.gmra.mxu0 %v52
  %v116 = vpop.f32.mrf.mxu0
  %v117 = vadd.f32 %v45, %v116
  %118 = vmatmul.f32.gmra.mxu0 %v55
  %v119 = vpop.f32.mrf.mxu0
  %v120 = vadd.f32 %v45, %v119
  %121 = vmatmul.f32.gmra.mxu0 %v58
  %v122 = vpop.f32.mrf.mxu0
  %v123 = vadd.f32 %v45, %v122
  %124 = vmatmul.f32.gmra.mxu0 %v61
  %v125 = vpop.f32.mrf.mxu0
  %v126 = vadd.f32 %v45, %v125
  %127 = vmatmul.f32.gmra.mxu0 %v64
  %v128 = vpop.f32.mrf.mxu0
  %v129 = vadd.f32 %v45, %v128
  %130 = vmatmul.f32.gmra.mxu0 %v67
  %v131 = vpop.f32.mrf.mxu0
  %v132 = vadd.f32 %v45, %v131
  %133 = vmatmul.f32.gmra.mxu0 %v70
  %v134 = vpop.f32.mrf.mxu0
  %v135 = vadd.f32 %v45, %v134
  %136 = vmatmul.f32.gmra.mxu0 %v73
  %v137 = vpop.f32.mrf.mxu0
  %v138 = vadd.f32 %v45, %v137
  %139 = vmatmul.f32.gmra.mxu0 %v76
  %v140 = vpop.f32.mrf.mxu0
  %v141 = vadd.f32 %v45, %v140
  %142 = vmatmul.f32.gmra.mxu0 %v79
  %v143 = vpop.f32.mrf.mxu0
  %v144 = vadd.f32 %v45, %v143
  %145 = vmatmul.f32.gmra.mxu0 %v82
  %v146 = vpop.f32.mrf.mxu0
  %v147 = vadd.f32 %v45, %v146
  %148 = vmatmul.f32.gmra.mxu0 %v85
  %v149 = vpop.f32.mrf.mxu0
  %v150 = vadd.f32 %v45, %v149
  %151 = vmatmul.f32.gmra.mxu0 %v88
  %v152 = vpop.f32.mrf.mxu0
  %v153 = vadd.f32 %v45, %v152
  %154 = vmatmul.f32.gmra.mxu0 %v91
  %v155 = vpop.f32.mrf.mxu0
  %v156 = vadd.f32 %v45, %v155
  %157 = vmatmul.f32.gmra.mxu0 %v94
  %v158 = vpop.f32.mrf.mxu0
  %v159 = vadd.f32 %v45, %v158
  %160 = vdwg.mxu0
  %161 = vst.msk [vmem:[%s6] sm:$0xff] %vm47, %v114
  %162 = vst.msk [vmem:[%s6 + $0x8] sm:$0xff] %vm47, %v117
  %163 = vst.msk [vmem:[%s6 + $0x10] sm:$0xff] %vm47, %v120
  %164 = vst.msk [vmem:[%s6 + $0x18] sm:$0xff] %vm47, %v123
  %165 = vst.msk [vmem:[%s6 + $0x20] sm:$0xff] %vm47, %v126
  %166 = vst.msk [vmem:[%s6 + $0x28] sm:$0xff] %vm47, %v129
  %167 = vst.msk [vmem:[%s6 + $0x30] sm:$0xff] %vm47, %v132
  %168 = vst.msk [vmem:[%s6 + $0x38] sm:$0xff] %vm47, %v135
  %s169 = scalar_lea.vmem %s6, 80
  %170 = vst.msk [vmem:[%s169] sm:$0xff] %vm47, %v138
  %171 = vst.msk [vmem:[%s169 + $0x8] sm:$0xff] %vm47, %v141
  %172 = vst.msk [vmem:[%s169 + $0x10] sm:$0xff] %vm47, %v144
  %173 = vst.msk [vmem:[%s169 + $0x18] sm:$0xff] %vm47, %v147
  %174 = vst.msk [vmem:[%s169 + $0x20] sm:$0xff] %vm47, %v150
  %175 = vst.msk [vmem:[%s169 + $0x28] sm:$0xff] %vm47, %v153
  %176 = vst.msk [vmem:[%s169 + $0x30] sm:$0xff] %vm47, %v156
  %177 = vst.msk [vmem:[%s169 + $0x38] sm:$0xff] %vm47, %v159
  %v178 = vld [vmem:[%s1] sm:$0xff]
  %v179 = vld [vmem:[%s1 + $0x8] sm:$0xff]
  %v180 = vld [vmem:[%s1 + $0x10] sm:$0xff]
  %v181 = vld [vmem:[%s1 + $0x18] sm:$0xff]
  %v182 = vld [vmem:[%s3] sm:$0xff]
  %v183 = vld [vmem:[%s3 + $0x8] sm:$0xff]
  %v184 = vld [vmem:[%s3 + $0x10] sm:$0xff]
  %v185 = vld [vmem:[%s3 + $0x18] sm:$0xff]
  %v186 = vld [vmem:[%s3 + $0x20] sm:$0xff]
  %v187 = vld [vmem:[%s3 + $0x28] sm:$0xff]
  %v188 = vld [vmem:[%s3 + $0x30] sm:$0xff]
  %v189 = vld [vmem:[%s3 + $0x38] sm:$0xff]
  %v190 = vld [vmem:[%s5] sm:$0x1]
  %v192 = vperm.slane %v190, 0
  %vm194 = vcmask 523264
  %v196 = vsel %vm194, %v178, 0
  %v199 = vsel %vm194, %v179, 0
  %v202 = vsel %vm194, %v180, 0
  %v205 = vsel %vm194, %v181, 0
  %207 = vmatpush.msra.mxu0 0.0
  %208 = vmatpush.msra.mxu0 0.0
  %209 = vmatpush.msra.mxu0 0.0
  %210 = vmatpush.msra.mxu0 0.0
  %211 = vmatpush.msra.mxu0 0.0
  %212 = vmatpush.msra.mxu0 0.0
  %213 = vmatpush.msra.mxu0 0.0
  %214 = vmatpush.msra.mxu0 0.0
  %215 = vmatpush.msra.mxu0 %v189
  %216 = vmatpush.msra.mxu0 %v188
  %217 = vmatpush.msra.mxu0 %v187
  %218 = vmatpush.msra.mxu0 %v186
  %219 = vmatpush.msra.mxu0 %v185
  %220 = vmatpush.msra.mxu0 %v184
  %221 = vmatpush.msra.mxu0 %v183
  %222 = vmatpush.msra.mxu0 %v182
  %223 = vmatmul.f32.gmra.mxu0 %v196
  %v224 = vpop.f32.mrf.mxu0
  %v225 = vadd.f32 %v192, %v224
  %226 = vmatmul.f32.gmra.mxu0 %v199
  %v227 = vpop.f32.mrf.mxu0
  %v228 = vadd.f32 %v192, %v227
  %229 = vmatmul.f32.gmra.mxu0 %v202
  %v230 = vpop.f32.mrf.mxu0
  %v231 = vadd.f32 %v192, %v230
  %232 = vmatmul.f32.gmra.mxu0 %v205
  %v233 = vpop.f32.mrf.mxu0
  %v234 = vadd.f32 %v192, %v233
  %235 = vdwg.mxu0
  %236 = vst.msk [vmem:[%s6 + $0x40] sm:$0xff] %vm47, %v225
  %237 = vst.msk [vmem:[%s6 + $0x48] sm:$0xff] %vm47, %v228
  %238 = vst.msk [vmem:[%s169 + $0x40] sm:$0xff] %vm47, %v231
  %239 = vst.msk [vmem:[%s169 + $0x48] sm:$0xff] %vm47, %v234
  // Predicated region
  $region26: #{tpu_custom_call.1} parent=0 // pred_check
    _
  $region27: #{tpu_custom_call.1} parent=0 // pred_check_branch
    %241 = sbr.rel (0) target = $region29
  $region28: #{tpu_custom_call.1} parent=0 // pred_region
    _
  $region29: #{tpu_custom_call.1} parent=0 // pred_fallthru
    _
  // Predicated region
  $region30: #{tpu_custom_call.1} parent=0 // pred_check
    _
  $region31: #{tpu_custom_call.1} parent=0 // pred_check_branch
    %243 = sbr.rel (0) target = $region33
  $region32: #{tpu_custom_call.1} parent=0 // pred_region
    _
  $region33: #{tpu_custom_call.1} parent=0 // pred_fallthru
    _

</llo_original>
